<compile_context>
chip_gen: v7x
topology: tpu7x:2x2x1
jax: 0.10.0
libtpu: 0.0.40
codegen_flags: <defaults>
</compile_context>

<pallas_src>
import jax
import jax.numpy as jnp
from jax.experimental import pallas as pl
from jax.experimental.pallas import tpu as pltpu


def _round_up(x: int, m: int) -> int:
    return (x + m - 1) // m * m


# ---------------------------------------------------------------------------
# Tiled path: grid = (B/tm, F/tn, H/tk), reduction axis (k) last.
# ---------------------------------------------------------------------------
def _body_adapter_kernel(x_ref, w_ref, b_ref, o_ref):
    """One (tm, tn) output tile, accumulated in-place over the k grid axis.

    x_ref: (tm, tk) f32   w_ref: (tk, tn) f32
    b_ref: (1, tn)  f32   o_ref: (tm, tn) f32 (resident accumulator)
    """
    k = pl.program_id(2)

    @pl.when(k == 0)
    def _():
        # Initialize the resident output tile with the broadcast bias.
        o_ref[...] = jnp.broadcast_to(b_ref[...], o_ref.shape)

    # Cast to bf16 in-kernel (free filler on the VPU); f32 MXU accumulation.
    o_ref[...] += jnp.dot(
        x_ref[...].astype(jnp.bfloat16),
        w_ref[...].astype(jnp.bfloat16),
        preferred_element_type=jnp.float32,
    )


# ---------------------------------------------------------------------------
# Tiny-shape fast path: whole arrays in VMEM, single kernel invocation.
# ---------------------------------------------------------------------------
def _body_adapter_small_kernel(x_ref, w_ref, b_ref, o_ref):
    o_ref[...] = (
        jnp.dot(
            x_ref[...].astype(jnp.bfloat16),
            w_ref[...].astype(jnp.bfloat16),
            preferred_element_type=jnp.float32,
        )
        + b_ref[...]
    ).astype(o_ref.dtype)


def body_adapter_forward(x, w, b, *, tm=256, tn=512, tk=1024):
    """x: (batch, 1, hidden) f32 -> (batch, feature_dim) f32.

    Equivalent to `Linear(hidden, feature_dim)(x).squeeze(1)` (the wrapped
    model's forward followed by BodyAdapter's squeeze).  Precision contract:
    bf16 MXU operands (cast in-kernel), f32 accumulation, f32 output.
    """
    batch, seq, hidden = x.shape
    assert seq == 1, "BodyAdapter squeezes dim 1; inner model emits seq=1"
    feature_dim = w.shape[1]

    # squeeze(1) — pure layout no-op on contiguous data.
    x2d = x.reshape(batch, hidden).astype(jnp.float32)
    w2d = w.astype(jnp.float32)
    b2d = b.reshape(1, feature_dim).astype(jnp.float32)

    # ---- Tiny-shape fast path: everything fits comfortably in VMEM. -------
    total_bytes = 4 * (x2d.size + w2d.size + b2d.size + batch * feature_dim)
    if total_bytes <= (1 << 20):
        out = pl.pallas_call(
            _body_adapter_small_kernel,
            out_shape=jax.ShapeDtypeStruct((batch, feature_dim), jnp.float32),
        )(x2d, w2d, b2d)
        return out

    # ---- Tiled path. -------------------------------------------------------
    # Clamp tiles for small dims, keeping (8,128) alignment and lane-dense
    # (multiple-of-128) output tiles.  tm >= batch when possible so W is
    # streamed from HBM exactly once.
    tm = min(tm, _round_up(batch, 8))
    tn = min(tn, _round_up(feature_dim, 128))
    tk = min(tk, _round_up(hidden, 128))

    Bp = _round_up(batch, tm)
    Fp = _round_up(feature_dim, tn)
    Hp = _round_up(hidden, tk)

    # v7x megacore: guarantee a parallel grid axis with extent >= 2 when the
    # batch axis collapses to one tile (no effect on v5e/v6e correctness;
    # tn stays a 256-multiple so the v6e/v7x 2x256x256 MXU stays filled).
    if Bp == tm and Fp == tn and tn % 512 == 0:
        tn //= 2  # Fp is still divisible by tn

    # Conditional zero-padding (separate XLA passes only when needed); padded
    # rows/cols contribute nothing to the reduction and are sliced off below.
    x_p = x2d
    if (Bp, Hp) != (batch, hidden):
        x_p = jnp.pad(x2d, ((0, Bp - batch), (0, Hp - hidden)))
    w_p = w2d
    if (Hp, Fp) != (hidden, feature_dim):
        w_p = jnp.pad(w2d, ((0, Hp - hidden), (0, Fp - feature_dim)))
    b_p = b2d
    if Fp != feature_dim:
        b_p = jnp.pad(b2d, ((0, 0), (0, Fp - feature_dim)))

    grid = (Bp // tm, Fp // tn, Hp // tk)

    flops = 2 * batch * hidden * feature_dim
    bytes_accessed = 4 * (x_p.size + w_p.size + b_p.size + Bp * Fp)

    out_p = pl.pallas_call(
        _body_adapter_kernel,
        out_shape=jax.ShapeDtypeStruct((Bp, Fp), jnp.float32),
        grid=grid,
        in_specs=[
            pl.BlockSpec((tm, tk), lambda i, j, k: (i, k)),
            pl.BlockSpec((tk, tn), lambda i, j, k: (k, j)),
            pl.BlockSpec((1, tn), lambda i, j, k: (0, j)),
        ],
        out_specs=pl.BlockSpec((tm, tn), lambda i, j, k: (i, j)),
        compiler_params=pltpu.CompilerParams(
            dimension_semantics=("parallel", "parallel", "arbitrary"),
            vmem_limit_bytes=32 * 1024 * 1024,  # safe on v7x (64 MiB physical)
        ),
        cost_estimate=pl.CostEstimate(
            flops=flops, transcendentals=0, bytes_accessed=bytes_accessed
        ),
    )(x_p, w_p, b_p)

    if (Bp, Fp) != (batch, feature_dim):
        out_p = out_p[:batch, :feature_dim]
    return out_p


if __name__ == "__main__":
    key = jax.random.PRNGKey(0)
    kx, kw, kb, kx2, kw2, kb2 = jax.random.split(key, 6)

    # --- Small shapes consistent with the module (exercises the tiny path):
    # batch=2, seq=1, hidden=32, feature_dim=64.
    batch, hidden, feature_dim = 2, 32, 64
    x = jax.random.normal(kx, (batch, 1, hidden), dtype=jnp.float32)
    w = jax.random.normal(kw, (hidden, feature_dim), dtype=jnp.float32) * 0.05
    b = jax.random.normal(kb, (feature_dim,), dtype=jnp.float32) * 0.05

    out = jax.block_until_ready(body_adapter_forward(x, w, b))
    assert out.shape == (batch, feature_dim)

    x2d = x.reshape(batch, hidden)
    ref_bf16 = jnp.dot(
        x2d.astype(jnp.bfloat16), w.astype(jnp.bfloat16),
        preferred_element_type=jnp.float32,
    ) + b
    assert jnp.allclose(out, ref_bf16, atol=1e-3, rtol=1e-3)
    ref_f32 = x2d @ w + b
    assert jnp.allclose(out, ref_f32, atol=5e-2, rtol=5e-2)

    # --- Medium shapes (exercises the tiled / megacore-split path).
    batch2, hidden2, feature_dim2 = 64, 1024, 512
    x_l = jax.random.normal(kx2, (batch2, 1, hidden2), dtype=jnp.float32)
    w_l = jax.random.normal(kw2, (hidden2, feature_dim2), dtype=jnp.float32) * 0.02
    b_l = jax.random.normal(kb2, (feature_dim2,), dtype=jnp.float32) * 0.02

    out_l = jax.block_until_ready(body_adapter_forward(x_l, w_l, b_l))
    assert out_l.shape == (batch2, feature_dim2)

    x_l2d = x_l.reshape(batch2, hidden2)
    ref_l_bf16 = jnp.dot(
        x_l2d.astype(jnp.bfloat16), w_l.astype(jnp.bfloat16),
        preferred_element_type=jnp.float32,
    ) + b_l
    assert jnp.allclose(out_l, ref_l_bf16, atol=1e-2, rtol=1e-2)
    ref_l_f32 = x_l2d @ w_l + b_l
    assert jnp.allclose(out_l, ref_l_f32, atol=2e-1, rtol=5e-2)

    # TODO(synk): the PyTorch try/except fallback over `remember_step` is
    # host-side control flow with no kernel-level equivalent; the kernel
    # implements the model(x).squeeze(1) path.
    print("KERNEL_OK")
</pallas_src>

<mosaic_0001>
module attributes {stable_mosaic.version = 11 : i64} {
  func.func @_body_adapter_small_kernel(%arg0: memref<2x32xf32, #tpu.memory_space<vmem>>, %arg1: memref<32x64xf32, #tpu.memory_space<vmem>>, %arg2: memref<1x64xf32, #tpu.memory_space<vmem>>, %arg3: memref<2x64xf32, #tpu.memory_space<vmem>>) attributes {dimension_semantics = [], scalar_prefetch = 0 : i64, scratch_operands = 0 : i64, tpu.core_type = #tpu.core_type<tc>} {
    %c0 = arith.constant 0 : index
    %c0_0 = arith.constant 0 : index
    %0 = vector.load %arg0[%c0, %c0_0] : memref<2x32xf32, #tpu.memory_space<vmem>>, vector<2x32xf32>
    %1 = arith.truncf %0 : vector<2x32xf32> to vector<2x32xbf16>
    %c0_1 = arith.constant 0 : index
    %c0_2 = arith.constant 0 : index
    %2 = vector.load %arg1[%c0_1, %c0_2] : memref<32x64xf32, #tpu.memory_space<vmem>>, vector<32x64xf32>
    %3 = arith.truncf %2 : vector<32x64xf32> to vector<32x64xbf16>
    %cst = arith.constant dense<0.000000e+00> : vector<2x64xf32>
    %4 = tpu.matmul %1, %3, %cst {dimension_numbers = #tpu.dot_dimension_numbers<[1], [0], [0], [1], [0, 0, 1, 1], [], []>} : vector<2x32xbf16>, vector<32x64xbf16>, vector<2x64xf32> -> vector<2x64xf32>
    %c0_3 = arith.constant 0 : index
    %c0_4 = arith.constant 0 : index
    %5 = vector.load %arg2[%c0_3, %c0_4] : memref<1x64xf32, #tpu.memory_space<vmem>>, vector<1x64xf32>
    %6 = vector.broadcast %5 : vector<1x64xf32> to vector<2x64xf32>
    %7 = arith.addf %4, %6 : vector<2x64xf32>
    %c0_5 = arith.constant 0 : index
    %c0_6 = arith.constant 0 : index
    %8 = vector.load %arg3[%c0_5, %c0_6] : memref<2x64xf32, #tpu.memory_space<vmem>>, vector<2x64xf32>
    tpu.vector_store %arg3[%c0_5, %c0_6], %7 {strides = array<i32>} : memref<2x64xf32, #tpu.memory_space<vmem>>, vector<2x64xf32>,
    return
  }
}

</mosaic_0001>

<llo_original>
// kernel: tpu_custom_call.1
$region0: #{tpu_custom_call.1}
  #allocation0 [shape = 'u32[]', space=smem, size = 0x4, offset = 0x4, fixed_abs, tag = 'smem constant byte address 0x4 - core index']
  #allocation1 [shape = 'u32[144,128]{1,0:T(1,128)}', space=vmem, size = 0x12000, scoped, tag = 'internal scratch']
  %s0 = inlined_call_operand.hbm [shape: f32[2,32], index: 0, kind: input, shape index: {}]
  %s1 = inlined_call_operand.hbm [shape: f32[32,64], index: 1, kind: input, shape index: {}]
  %s2 = inlined_call_operand.vmem [shape: f32[1,64], index: 2, kind: input, shape index: {}]
  %s3 = inlined_call_operand.hbm [shape: f32[2,64], index: 3, kind: output, shape index: {}]
  %s4 = sld [smem:[#allocation0]]
  $region30: #{tpu_custom_call.1} parent=0
    _
  %s6 = ssub.s32 1, %s4
  %s7 = scalar_select 0, %s6, %s4
  $region1: #{tpu_custom_call.1} parent=0
    #allocation2 [shape = 'u8[1024]{0}', space=vmem, size = 0x400, scoped, tag = 'input window, operand 0, single buffered']
    #allocation3 [shape = 's32[1]{0}', space=sflag, size = 0x4, scoped, tag = 'scoped memory for tpu_custom_call.1']
    #allocation4 [shape = 's32[1]{0}', space=sflag, size = 0x4, scoped, tag = 'scoped memory for tpu_custom_call.1']
    #allocation5 [shape = 'u8[16384]{0}', space=vmem, size = 0x4000, scoped, tag = 'input window, operand 1, single buffered']
    #allocation6 [shape = 's32[1]{0}', space=sflag, size = 0x4, scoped, tag = 'scoped memory for tpu_custom_call.1']
    #allocation7 [shape = 'u8[1024]{0}', space=vmem, size = 0x400, scoped, tag = 'output window, operand 0, single buffered']
    %8 = vsyncpa [#allocation3], 0
    %9 = vsyncpa [#allocation6], 0
    %10 = vsyncpa [#allocation4], 0
    // Predicated region
    $region2: #{tpu_custom_call.1} parent=1 // pred_check
      _
    $region3: #{tpu_custom_call.1} parent=1 // pred_check_branch
      %12 = sbr.rel (0) target = $region5
    $region4: #{tpu_custom_call.1} parent=1 // pred_region
      %s14 = ssub.s32 32, 32
      %15 = vsyncadd [#allocation3], %s14
      %s17 = sshll.u32 [#allocation2], 4
      %s18 = int_to_ptr.vmem [resolvable:$true] %s17
      %20 = dma.hbm_to_vmem [thread:$0]  %s0, 32, %s18, [#allocation3]
    $region5: #{tpu_custom_call.1} parent=1 // pred_fallthru
      _
    // Predicated region
    $region6: #{tpu_custom_call.1} parent=1 // pred_check
      _
    $region7: #{tpu_custom_call.1} parent=1 // pred_check_branch
      %22 = sbr.rel (0) target = $region9
    $region8: #{tpu_custom_call.1} parent=1 // pred_region
      %s24 = ssub.s32 512, 512
      %25 = vsyncadd [#allocation6], %s24
      %s26 = sshll.u32 [#allocation5], 4
      %s27 = int_to_ptr.vmem [resolvable:$true] %s26
      %32 = dma.hbm_to_vmem [thread:$0]  %s1, 512, %s27, [#allocation6], 128, 128, 8
    $region9: #{tpu_custom_call.1} parent=1 // pred_fallthru
      _
    // Predicated region
    $region10: #{tpu_custom_call.1} parent=1 // pred_check
      _
    $region11: #{tpu_custom_call.1} parent=1 // pred_check_branch
      %34 = sbr.rel (0) target = $region13
    $region12: #{tpu_custom_call.1} parent=1 // pred_region
      _
    $region13: #{tpu_custom_call.1} parent=1 // pred_fallthru
      _
    // Predicated region
    $region14: #{tpu_custom_call.1} parent=1 // pred_check
      _
    $region15: #{tpu_custom_call.1} parent=1 // pred_check_branch
      %36 = sbr.rel (0) target = $region17
    $region16: #{tpu_custom_call.1} parent=1 // pred_region
      %37 = dma.done [#allocation3], 32
    $region17: #{tpu_custom_call.1} parent=1 // pred_fallthru
      _
    // Predicated region
    $region18: #{tpu_custom_call.1} parent=1 // pred_check
      _
    $region19: #{tpu_custom_call.1} parent=1 // pred_check_branch
      %39 = sbr.rel (0) target = $region21
    $region20: #{tpu_custom_call.1} parent=1 // pred_region
      %40 = dma.done [#allocation6], 512
    $region21: #{tpu_custom_call.1} parent=1 // pred_fallthru
      _
    %v42 = vld [vmem:[#allocation2] sm:$0x3]
    %v43 = vpack.c.bf16 %v42, %v42
    %v44 = vld [vmem:[#allocation5] sm:$0xff]
    %v45 = vld [vmem:[#allocation5 + $0x8] sm:$0xff]
    %v46 = vld [vmem:[#allocation5 + $0x10] sm:$0xff]
    %v47 = vld [vmem:[#allocation5 + $0x18] sm:$0xff]
    %v48 = vpack.c.bf16 %v45, %v44
    %v49 = vpack.c.bf16 %v47, %v46
    %v50 = vld [vmem:[%s2] sm:$0x1]
    %v52 = vlaneseq
    %v53 = vshrl.u32 %v52, 7
    %v54 = vsub.s32 0, %v53
    %v55 = vrot.slane %v50, %v54
    %vm57 = vcmask 261120
    %v59 = vsel %vm57, %v43, 0
    %61 = vmatprep.subr.bf16.mxu0 0
    %62 = vmatpush1.bf16.msra.mxu0 %v48
    %63 = vmatprep.subr.bf16.mxu0 0
    %64 = vmatpush1.bf16.msra.mxu0 %v49
    %65 = vmatprep.subr.bf16.mxu0 0
    %66 = vmatpush1.bf16.msra.mxu0 0
    %67 = vmatprep.subr.bf16.mxu0 0
    %68 = vmatpush1.bf16.msra.mxu0 0
    %69 = vmatprep.subr.bf16.mxu0 0
    %70 = vmatpush1.bf16.msra.mxu0 0
    %71 = vmatprep.subr.bf16.mxu0 0
    %72 = vmatpush1.bf16.msra.mxu0 0
    %73 = vmatprep.subr.bf16.mxu0 0
    %74 = vmatpush1.bf16.msra.mxu0 0
    %75 = vmatprep.subr.bf16.mxu0 0
    %76 = vmatpush1.bf16.msra.mxu0 0
    %77 = vmatprep.subr.bf16.mxu0 0
    %78 = vmatpush1.bf16.msra.mxu0 0
    %79 = vmatprep.subr.bf16.mxu0 0
    %80 = vmatpush1.bf16.msra.mxu0 0
    %81 = vmatprep.subr.bf16.mxu0 0
    %82 = vmatpush1.bf16.msra.mxu0 0
    %83 = vmatprep.subr.bf16.mxu0 0
    %84 = vmatpush1.bf16.msra.mxu0 0
    %85 = vmatprep.subr.bf16.mxu0 0
    %86 = vmatpush1.bf16.msra.mxu0 0
    %87 = vmatprep.subr.bf16.mxu0 0
    %88 = vmatpush1.bf16.msra.mxu0 0
    %89 = vmatprep.subr.bf16.mxu0 0
    %90 = vmatpush1.bf16.msra.mxu0 0
    %91 = vmatprep.subr.bf16.mxu0 0
    %92 = vmatpush1.bf16.msra.mxu0 0
    %93 = vmatprep.mubr.bf16.mxu0 0
    %94 = vmatmul.mubr.bf16.gmra.mrb[0].mxu0 %v59
    %v95 = vpop.f32.mrb[0].mxu0
    %v96 = vadd.f32 %v55, %v95
    %v97 = vpop.f32.mrb[0].mxu0
    %v98 = vpop.f32.mrb[0].mxu0
    %v99 = vpop.f32.mrb[0].mxu0
    %100 = vdwg.mxu0
    %vm101 = vcmask 517120
    %102 = vst.msk [vmem:[#allocation7] sm:$0x3] %vm101, %v96
    // Predicated region
    $region22: #{tpu_custom_call.1} parent=1 // pred_check
      _
    $region23: #{tpu_custom_call.1} parent=1 // pred_check_branch
      %104 = sbr.rel (0) target = $region25
    $region24: #{tpu_custom_call.1} parent=1 // pred_region
      %s106 = ssub.s32 32, 32
      %107 = vsyncadd [#allocation4], %s106
      %s109 = sshll.u32 [#allocation7], 4
      %s110 = int_to_ptr.vmem [resolvable:$true] %s109
      %112 = dma.vmem_to_hbm [thread:$0]  %s110, 32, %s3, [#allocation4]
    $region25: #{tpu_custom_call.1} parent=1 // pred_fallthru
      _
    // Predicated region
    $region26: #{tpu_custom_call.1} parent=1 // pred_check
      _
    $region27: #{tpu_custom_call.1} parent=1 // pred_check_branch
      %114 = sbr.rel (0) target = $region29
    $region28: #{tpu_custom_call.1} parent=1 // pred_region
      %115 = dma.done [#allocation4], 32
    $region29: #{tpu_custom_call.1} parent=1 // pred_fallthru
      _
    %116 = vsyncpa [#allocation3], 1
    %117 = vsyncpa [#allocation6], 1
    %118 = vsyncpa [#allocation4], 1

</llo_original>
